<compile_context>
chip_gen: v5e
topology: v5e:2x2
jax: 0.10.0
libtpu: 0.0.40
codegen_flags: <defaults>
</compile_context>

<pallas_src>
import functools

import jax
import jax.numpy as jnp
from jax.experimental import pallas as pl
from jax.experimental.pallas import tpu as pltpu

BN_EPS = 1e-5
NEG_INF = -1e30
NUM_CLASSES = 5
OUT_LANES = 8            # narrow padded output width (full minor dim -> legal block)
DEFAULT_TB = 2048        # ~8-10 MB VMEM/step: fits v5e/v6e (128 MiB) and v7x (64 MiB)


def _round_up(n, m):
    return ((n + m - 1) // m) * m


def _const_spec(shape):
    """Full-extent block with a constant index_map -> stays VMEM-resident."""
    return pl.BlockSpec(tuple(shape), lambda i: (0,) * len(shape))


# ---------------------------------------------------------------------------
# Pass 1: per-tile partial batch statistics of ReLU(x @ W1 + b1)
#   (training-mode BatchNorm1d; partials reduced in the wrapper)
# ---------------------------------------------------------------------------
def _bn_stats_kernel(x_ref, w1_ref, b1_ref, stat_ref, *, tb, batch):
    i = pl.program_id(0)

    x = x_ref[...].astype(jnp.float32)                                 # (TB, 6)
    h = jnp.maximum(
        jnp.dot(x, w1_ref[...], preferred_element_type=jnp.float32) + b1_ref[...],
        0.0)                                                           # (TB, 60)

    # Mask ragged-tail rows (rows >= batch) so they don't contaminate the stats.
    row = jax.lax.broadcasted_iota(jnp.int32, (tb, 1), 0) + i * tb
    h = jnp.where(row < batch, h, 0.0)

    s = jnp.sum(h, axis=0, keepdims=True)                              # (1, 60)
    ss = jnp.sum(h * h, axis=0, keepdims=True)                         # (1, 60)
    stat_ref[...] = jnp.concatenate([s, ss], axis=0)[None, :, :]       # (1, 2, 60)


# ---------------------------------------------------------------------------
# Pass 2: full forward per batch tile (BatchNorm folded into W2/b2)
# ---------------------------------------------------------------------------
def _forward_kernel(x_ref, w1_ref, b1_ref, w2_ref, b2_ref,
                    w3_ref, b3_ref, w4_ref, b4_ref, out_ref):
    x = x_ref[...].astype(jnp.float32)                                 # (TB, 6)

    # Linear(6, 60) + ReLU
    h = jnp.maximum(
        jnp.dot(x, w1_ref[...], preferred_element_type=jnp.float32) + b1_ref[...],
        0.0)                                                           # (TB, 60)

    # Linear(60, 100) + ReLU  (BatchNorm folded into w2/b2 in the wrapper)
    h = jnp.maximum(
        jnp.dot(h, w2_ref[...], preferred_element_type=jnp.float32) + b2_ref[...],
        0.0)                                                           # (TB, 100)

    # Linear(100, 50) + ReLU
    h = jnp.maximum(
        jnp.dot(h, w3_ref[...], preferred_element_type=jnp.float32) + b3_ref[...],
        0.0)                                                           # (TB, 50)

    # Linear(50, 5) padded to 8 lanes: pad columns have zero weights and -1e30
    # bias, so softmax over 8 lanes is exact and padded lanes get probability 0.
    logits = jnp.dot(h, w4_ref[...], preferred_element_type=jnp.float32) + b4_ref[...]
    m = jnp.max(logits, axis=1, keepdims=True)
    e = jnp.exp(logits - m)
    out_ref[...] = e / jnp.sum(e, axis=1, keepdims=True)               # (TB, 8)


# ---------------------------------------------------------------------------
# Wrapper
# ---------------------------------------------------------------------------
def fault_classifier(x, params, *, tb=DEFAULT_TB):
    """x: (B, 6) float32. params: (w1,b1,gamma,beta,w2,b2,w3,b3,w4,b4)."""
    w1, b1, gamma, beta, w2, b2, w3, b3, w4, b4 = params
    B = x.shape[0]

    # Batch tile: multiple of 8 sublanes, capped at the (rounded-up) batch.
    tb = int(min(tb, _round_up(max(B, 1), 8)))
    tb = _round_up(tb, 8)
    num_tiles = pl.cdiv(B, tb)

    cparams = pltpu.CompilerParams(
        dimension_semantics=("parallel",),
        vmem_limit_bytes=32 * 1024 * 1024)

    # ---- Pass 1: per-tile partial sums / sums-of-squares --------------------
    stats_partial = pl.pallas_call(
        functools.partial(_bn_stats_kernel, tb=tb, batch=B),
        out_shape=jax.ShapeDtypeStruct((num_tiles, 2, 60), jnp.float32),
        grid_spec=pltpu.PrefetchScalarGridSpec(
            num_scalar_prefetch=0,
            grid=(num_tiles,),
            in_specs=[
                pl.BlockSpec((tb, 6), lambda i: (i, 0)),
                _const_spec(w1.shape),
                _const_spec(b1.shape),
            ],
            out_specs=pl.BlockSpec((1, 2, 60), lambda i: (i, 0, 0)),
        ),
        compiler_params=cparams,
    )(x, w1, b1)

    # Reduce partials; fold BatchNorm (biased batch variance, PyTorch train mode)
    # into a per-feature scale/shift, then into W2/b2 (exact: no ReLU between BN
    # and Linear(60,100)). Tiny (1,60)/(60,100) math, done in plain XLA.
    # NOTE: E[h^2]-mean^2 can cancel for data with huge feature means; guarded
    # with max(.,0). Switch to a centered two-pass formulation if that occurs.
    stats = jnp.sum(stats_partial, axis=0)                             # (2, 60)
    mean = stats[0:1, :] / B
    var = jnp.maximum(stats[1:2, :] / B - mean * mean, 0.0)
    bn_scale = gamma * jax.lax.rsqrt(var + BN_EPS)                     # (1, 60)
    bn_shift = beta - mean * bn_scale                                  # (1, 60)
    w2f = w2 * jnp.reshape(bn_scale, (60, 1))                          # (60, 100)
    b2f = b2 + bn_shift @ w2                                           # (1, 100)

    # Pad the final layer to 8 output lanes (zero weights, -1e30 bias).
    w4p = jnp.pad(w4, ((0, 0), (0, OUT_LANES - NUM_CLASSES)))
    b4p = jnp.pad(b4, ((0, 0), (0, OUT_LANES - NUM_CLASSES)),
                  constant_values=NEG_INF)

    cost = pl.CostEstimate(
        flops=2 * (6 * 60 + 60 * 100 + 100 * 50 + 50 * OUT_LANES) * B,
        transcendentals=OUT_LANES * B,
        bytes_accessed=(6 + OUT_LANES) * 4 * B + 64 * 1024)

    # ---- Pass 2: batch-tiled forward ----------------------------------------
    out = pl.pallas_call(
        _forward_kernel,
        out_shape=jax.ShapeDtypeStruct((B, OUT_LANES), jnp.float32),
        grid_spec=pltpu.PrefetchScalarGridSpec(
            num_scalar_prefetch=0,
            grid=(num_tiles,),
            in_specs=[
                pl.BlockSpec((tb, 6), lambda i: (i, 0)),
                _const_spec(w1.shape), _const_spec(b1.shape),
                _const_spec((60, 100)), _const_spec((1, 100)),
                _const_spec(w3.shape), _const_spec(b3.shape),
                _const_spec((50, OUT_LANES)), _const_spec((1, OUT_LANES)),
            ],
            out_specs=pl.BlockSpec((tb, OUT_LANES), lambda i: (i, 0)),
        ),
        compiler_params=cparams,
        cost_estimate=cost,
    )(x, w1, b1, w2f, b2f, w3, b3, w4p, b4p)

    return out[:, :NUM_CLASSES]


# ---------------------------------------------------------------------------
# Parameters + pure-JAX reference (for correctness check)
# ---------------------------------------------------------------------------
def init_params(key):
    """Synthetic params matching the PyTorch module shapes; weights are (in, out)."""
    dims = [(6, 60), (60, 100), (100, 50), (50, 5)]
    keys = jax.random.split(key, 2 * len(dims))
    lin = []
    for i, (din, dout) in enumerate(dims):
        bound = 1.0 / jnp.sqrt(jnp.float32(din))
        w = jax.random.uniform(keys[2 * i], (din, dout), jnp.float32, -bound, bound)
        b = jax.random.uniform(keys[2 * i + 1], (1, dout), jnp.float32, -bound, bound)
        lin.append((w, b))
    gamma = jnp.ones((1, 60), jnp.float32)      # BatchNorm1d defaults
    beta = jnp.zeros((1, 60), jnp.float32)
    (w1, b1), (w2, b2), (w3, b3), (w4, b4) = lin
    return (w1, b1, gamma, beta, w2, b2, w3, b3, w4, b4)


def _reference(x, params):
    w1, b1, gamma, beta, w2, b2, w3, b3, w4, b4 = params
    h = jnp.maximum(x @ w1 + b1, 0.0)
    mean = jnp.mean(h, axis=0, keepdims=True)
    var = jnp.mean((h - mean) ** 2, axis=0, keepdims=True)     # biased, training BN
    h = (h - mean) * jax.lax.rsqrt(var + BN_EPS) * gamma + beta
    h = jnp.maximum(h @ w2 + b2, 0.0)
    h = jnp.maximum(h @ w3 + b3, 0.0)
    logits = h @ w4 + b4
    return jax.nn.softmax(logits, axis=1)


if __name__ == "__main__":
    key = jax.random.PRNGKey(0)
    k_x, k_p = jax.random.split(key)

    B = 20
    x = jax.random.normal(k_x, (B, 6), dtype=jnp.float32)
    params = init_params(k_p)

    # tb=8 exercises a multi-tile grid + ragged-tail masking at small scale.
    fc = jax.jit(fault_classifier, static_argnames=("tb",))
    out = jax.block_until_ready(fc(x, params, tb=8))

    ref = _reference(x, params)

    assert out.shape == (B, NUM_CLASSES)
    row_sum_err = float(jnp.max(jnp.abs(jnp.sum(out, axis=1) - 1.0)))
    max_err = float(jnp.max(jnp.abs(out - ref)))
    assert row_sum_err < 1e-2, row_sum_err
    assert max_err < 5e-3, max_err
    print("KERNEL_OK")
</pallas_src>

<mosaic_0001>
module attributes {stable_mosaic.version = 11 : i64} {
  func.func @_bn_stats_kernel(%arg0: i32, %arg1: memref<8x6xf32, #tpu.memory_space<vmem>>, %arg2: memref<6x60xf32, #tpu.memory_space<vmem>>, %arg3: memref<1x60xf32, #tpu.memory_space<vmem>>, %arg4: memref<1x2x60xf32, #tpu.memory_space<vmem>>) attributes {dimension_semantics = [#tpu.dimension_semantics<parallel>], iteration_bounds = array<i64: 3>, scalar_prefetch = 0 : i64, scratch_operands = 0 : i64, tpu.core_type = #tpu.core_type<tc>, window_params = [{transform_indices = @transform_0, window_bounds = array<i64: 8, 6>}, {pipeline_mode = #tpu.pipeline_mode<synchronous>, transform_indices = @transform_1, window_bounds = array<i64: 6, 60>}, {pipeline_mode = #tpu.pipeline_mode<synchronous>, transform_indices = @transform_2, window_bounds = array<i64: 1, 60>}, {transform_indices = @transform_3, window_bounds = array<i64: 1, 2, 60>}]} {
    %c0 = arith.constant 0 : index
    %c0_0 = arith.constant 0 : index
    %0 = vector.load %arg1[%c0, %c0_0] : memref<8x6xf32, #tpu.memory_space<vmem>>, vector<8x6xf32>
    %c0_1 = arith.constant 0 : index
    %c0_2 = arith.constant 0 : index
    %1 = vector.load %arg2[%c0_1, %c0_2] : memref<6x60xf32, #tpu.memory_space<vmem>>, vector<6x60xf32>
    %cst = arith.constant dense<0.000000e+00> : vector<8x60xf32>
    %2 = tpu.matmul %0, %1, %cst {dimension_numbers = #tpu.dot_dimension_numbers<[1], [0], [0], [1], [0, 0, 1, 1], [], []>} : vector<8x6xf32>, vector<6x60xf32>, vector<8x60xf32> -> vector<8x60xf32>
    %c0_3 = arith.constant 0 : index
    %c0_4 = arith.constant 0 : index
    %3 = vector.load %arg3[%c0_3, %c0_4] : memref<1x60xf32, #tpu.memory_space<vmem>>, vector<1x60xf32>
    %4 = vector.broadcast %3 : vector<1x60xf32> to vector<8x60xf32>
    %5 = arith.addf %2, %4 : vector<8x60xf32>
    %cst_5 = arith.constant 0.000000e+00 : f32
    %6 = vector.broadcast %cst_5 : f32 to vector<8x60xf32>
    %7 = arith.maximumf %5, %6 : vector<8x60xf32>
    %8 = tpu.iota {dimensions = array<i32: 0>} : vector<8x1xi32>
    %c8_i32 = arith.constant 8 : i32
    %9 = arith.muli %arg0, %c8_i32 : i32
    %10 = vector.broadcast %9 : i32 to vector<8x1xi32>
    %11 = arith.addi %8, %10 : vector<8x1xi32>
    %c20_i32 = arith.constant 20 : i32
    %12 = vector.broadcast %c20_i32 : i32 to vector<8x1xi32>
    %13 = arith.cmpi slt, %11, %12 : vector<8x1xi32>
    %cst_6 = arith.constant 0.000000e+00 : f32
    %14 = vector.shape_cast %13 : vector<8x1xi1> to vector<8x1xi1>
    %15 = vector.broadcast %14 : vector<8x1xi1> to vector<8x60xi1>
    %16 = vector.broadcast %cst_6 : f32 to vector<8x60xf32>
    %17 = arith.select %15, %7, %16 : vector<8x60xi1>, vector<8x60xf32>
    %cst_7 = arith.constant dense<0.000000e+00> : vector<60xf32>
    %18 = vector.multi_reduction <add>, %17, %cst_7 [0] : vector<8x60xf32> to vector<60xf32>
    %19 = vector.shape_cast %18 : vector<60xf32> to vector<1x60xf32>
    %20 = arith.mulf %17, %17 : vector<8x60xf32>
    %cst_8 = arith.constant dense<0.000000e+00> : vector<60xf32>
    %21 = vector.multi_reduction <add>, %20, %cst_8 [0] : vector<8x60xf32> to vector<60xf32>
    %22 = vector.shape_cast %21 : vector<60xf32> to vector<1x60xf32>
    %23 = tpu.concatenate %19, %22 in 0 : vector<1x60xf32>, vector<1x60xf32> -> vector<2x60xf32>
    %24 = vector.shape_cast %23 : vector<2x60xf32> to vector<1x2x60xf32>
    %c0_9 = arith.constant 0 : index
    %c0_10 = arith.constant 0 : index
    %c0_11 = arith.constant 0 : index
    %25 = vector.load %arg4[%c0_9, %c0_10, %c0_11] : memref<1x2x60xf32, #tpu.memory_space<vmem>>, vector<1x2x60xf32>
    tpu.vector_store %arg4[%c0_9, %c0_10, %c0_11], %24 {strides = array<i32>} : memref<1x2x60xf32, #tpu.memory_space<vmem>>, vector<1x2x60xf32>,
    return
  }
  func.func @transform_0(%arg0: i32) -> (i32, i32) {
    %c0_i32 = arith.constant 0 : i32
    %c0_i32_0 = arith.constant 0 : i32
    return %arg0, %c0_i32 : i32, i32
  }
  func.func @transform_1(%arg0: i32) -> (i32, i32) {
    %c0_i32 = arith.constant 0 : i32
    %c0_i32_0 = arith.constant 0 : i32
    %c0_i32_1 = arith.constant 0 : i32
    return %c0_i32, %c0_i32_0 : i32, i32
  }
  func.func @transform_2(%arg0: i32) -> (i32, i32) {
    %c0_i32 = arith.constant 0 : i32
    %c0_i32_0 = arith.constant 0 : i32
    %c0_i32_1 = arith.constant 0 : i32
    return %c0_i32, %c0_i32_0 : i32, i32
  }
  func.func @transform_3(%arg0: i32) -> (i32, i32, i32) {
    %c0_i32 = arith.constant 0 : i32
    %c0_i32_0 = arith.constant 0 : i32
    %c0_i32_1 = arith.constant 0 : i32
    return %arg0, %c0_i32, %c0_i32_0 : i32, i32, i32
  }
}

module attributes {stable_mosaic.version = 11 : i64} {
  func.func @_forward_kernel(%arg0: i32, %arg1: memref<8x6xf32, #tpu.memory_space<vmem>>, %arg2: memref<6x60xf32, #tpu.memory_space<vmem>>, %arg3: memref<1x60xf32, #tpu.memory_space<vmem>>, %arg4: memref<60x100xf32, #tpu.memory_space<vmem>>, %arg5: memref<1x100xf32, #tpu.memory_space<vmem>>, %arg6: memref<100x50xf32, #tpu.memory_space<vmem>>, %arg7: memref<1x50xf32, #tpu.memory_space<vmem>>, %arg8: memref<50x8xf32, #tpu.memory_space<vmem>>, %arg9: memref<1x8xf32, #tpu.memory_space<vmem>>, %arg10: memref<8x8xf32, #tpu.memory_space<vmem>>) attributes {dimension_semantics = [#tpu.dimension_semantics<parallel>], iteration_bounds = array<i64: 3>, scalar_prefetch = 0 : i64, scratch_operands = 0 : i64, tpu.core_type = #tpu.core_type<tc>, window_params = [{transform_indices = @transform_0, window_bounds = array<i64: 8, 6>}, {pipeline_mode = #tpu.pipeline_mode<synchronous>, transform_indices = @transform_1, window_bounds = array<i64: 6, 60>}, {pipeline_mode = #tpu.pipeline_mode<synchronous>, transform_indices = @transform_2, window_bounds = array<i64: 1, 60>}, {pipeline_mode = #tpu.pipeline_mode<synchronous>, transform_indices = @transform_3, window_bounds = array<i64: 60, 100>}, {pipeline_mode = #tpu.pipeline_mode<synchronous>, transform_indices = @transform_4, window_bounds = array<i64: 1, 100>}, {pipeline_mode = #tpu.pipeline_mode<synchronous>, transform_indices = @transform_5, window_bounds = array<i64: 100, 50>}, {pipeline_mode = #tpu.pipeline_mode<synchronous>, transform_indices = @transform_6, window_bounds = array<i64: 1, 50>}, {pipeline_mode = #tpu.pipeline_mode<synchronous>, transform_indices = @transform_7, window_bounds = array<i64: 50, 8>}, {pipeline_mode = #tpu.pipeline_mode<synchronous>, transform_indices = @transform_8, window_bounds = array<i64: 1, 8>}, {transform_indices = @transform_9, window_bounds = array<i64: 8, 8>}]} {
    %c0 = arith.constant 0 : index
    %c0_0 = arith.constant 0 : index
    %0 = vector.load %arg1[%c0, %c0_0] : memref<8x6xf32, #tpu.memory_space<vmem>>, vector<8x6xf32>
    %c0_1 = arith.constant 0 : index
    %c0_2 = arith.constant 0 : index
    %1 = vector.load %arg2[%c0_1, %c0_2] : memref<6x60xf32, #tpu.memory_space<vmem>>, vector<6x60xf32>
    %cst = arith.constant dense<0.000000e+00> : vector<8x60xf32>
    %2 = tpu.matmul %0, %1, %cst {dimension_numbers = #tpu.dot_dimension_numbers<[1], [0], [0], [1], [0, 0, 1, 1], [], []>} : vector<8x6xf32>, vector<6x60xf32>, vector<8x60xf32> -> vector<8x60xf32>
    %c0_3 = arith.constant 0 : index
    %c0_4 = arith.constant 0 : index
    %3 = vector.load %arg3[%c0_3, %c0_4] : memref<1x60xf32, #tpu.memory_space<vmem>>, vector<1x60xf32>
    %4 = vector.broadcast %3 : vector<1x60xf32> to vector<8x60xf32>
    %5 = arith.addf %2, %4 : vector<8x60xf32>
    %cst_5 = arith.constant 0.000000e+00 : f32
    %6 = vector.broadcast %cst_5 : f32 to vector<8x60xf32>
    %7 = arith.maximumf %5, %6 : vector<8x60xf32>
    %c0_6 = arith.constant 0 : index
    %c0_7 = arith.constant 0 : index
    %8 = vector.load %arg4[%c0_6, %c0_7] : memref<60x100xf32, #tpu.memory_space<vmem>>, vector<60x100xf32>
    %cst_8 = arith.constant dense<0.000000e+00> : vector<8x100xf32>
    %9 = tpu.matmul %7, %8, %cst_8 {dimension_numbers = #tpu.dot_dimension_numbers<[1], [0], [0], [1], [0, 0, 1, 1], [], []>} : vector<8x60xf32>, vector<60x100xf32>, vector<8x100xf32> -> vector<8x100xf32>
    %c0_9 = arith.constant 0 : index
    %c0_10 = arith.constant 0 : index
    %10 = vector.load %arg5[%c0_9, %c0_10] : memref<1x100xf32, #tpu.memory_space<vmem>>, vector<1x100xf32>
    %11 = vector.broadcast %10 : vector<1x100xf32> to vector<8x100xf32>
    %12 = arith.addf %9, %11 : vector<8x100xf32>
    %cst_11 = arith.constant 0.000000e+00 : f32
    %13 = vector.broadcast %cst_11 : f32 to vector<8x100xf32>
    %14 = arith.maximumf %12, %13 : vector<8x100xf32>
    %c0_12 = arith.constant 0 : index
    %c0_13 = arith.constant 0 : index
    %15 = vector.load %arg6[%c0_12, %c0_13] : memref<100x50xf32, #tpu.memory_space<vmem>>, vector<100x50xf32>
    %cst_14 = arith.constant dense<0.000000e+00> : vector<8x50xf32>
    %16 = tpu.matmul %14, %15, %cst_14 {dimension_numbers = #tpu.dot_dimension_numbers<[1], [0], [0], [1], [0, 0, 1, 1], [], []>} : vector<8x100xf32>, vector<100x50xf32>, vector<8x50xf32> -> vector<8x50xf32>
    %c0_15 = arith.constant 0 : index
    %c0_16 = arith.constant 0 : index
    %17 = vector.load %arg7[%c0_15, %c0_16] : memref<1x50xf32, #tpu.memory_space<vmem>>, vector<1x50xf32>
    %18 = vector.broadcast %17 : vector<1x50xf32> to vector<8x50xf32>
    %19 = arith.addf %16, %18 : vector<8x50xf32>
    %cst_17 = arith.constant 0.000000e+00 : f32
    %20 = vector.broadcast %cst_17 : f32 to vector<8x50xf32>
    %21 = arith.maximumf %19, %20 : vector<8x50xf32>
    %c0_18 = arith.constant 0 : index
    %c0_19 = arith.constant 0 : index
    %22 = vector.load %arg8[%c0_18, %c0_19] : memref<50x8xf32, #tpu.memory_space<vmem>>, vector<50x8xf32>
    %cst_20 = arith.constant dense<0.000000e+00> : vector<8x8xf32>
    %23 = tpu.matmul %21, %22, %cst_20 {dimension_numbers = #tpu.dot_dimension_numbers<[1], [0], [0], [1], [0, 0, 1, 1], [], []>} : vector<8x50xf32>, vector<50x8xf32>, vector<8x8xf32> -> vector<8x8xf32>
    %c0_21 = arith.constant 0 : index
    %c0_22 = arith.constant 0 : index
    %24 = vector.load %arg9[%c0_21, %c0_22] : memref<1x8xf32, #tpu.memory_space<vmem>>, vector<1x8xf32>
    %25 = vector.broadcast %24 : vector<1x8xf32> to vector<8x8xf32>
    %26 = arith.addf %23, %25 : vector<8x8xf32>
    %cst_23 = arith.constant dense<0xFF800000> : vector<8xf32>
    %27 = vector.multi_reduction <maximumf>, %26, %cst_23 [1] : vector<8x8xf32> to vector<8xf32>
    %28 = vector.shape_cast %27 : vector<8xf32> to vector<8x1xf32>
    %29 = vector.broadcast %28 : vector<8x1xf32> to vector<8x8xf32>
    %30 = arith.subf %26, %29 : vector<8x8xf32>
    %31 = math.exp %30 : vector<8x8xf32>
    %cst_24 = arith.constant dense<0.000000e+00> : vector<8xf32>
    %32 = vector.multi_reduction <add>, %31, %cst_24 [1] : vector<8x8xf32> to vector<8xf32>
    %33 = vector.shape_cast %32 : vector<8xf32> to vector<8x1xf32>
    %34 = vector.broadcast %33 : vector<8x1xf32> to vector<8x8xf32>
    %35 = arith.divf %31, %34 : vector<8x8xf32>
    %c0_25 = arith.constant 0 : index
    %c0_26 = arith.constant 0 : index
    %36 = vector.load %arg10[%c0_25, %c0_26] : memref<8x8xf32, #tpu.memory_space<vmem>>, vector<8x8xf32>
    tpu.vector_store %arg10[%c0_25, %c0_26], %35 {strides = array<i32>} : memref<8x8xf32, #tpu.memory_space<vmem>>, vector<8x8xf32>,
    return
  }
  func.func @transform_0(%arg0: i32) -> (i32, i32) {
    %c0_i32 = arith.constant 0 : i32
    %c0_i32_0 = arith.constant 0 : i32
    return %arg0, %c0_i32 : i32, i32
  }
  func.func @transform_1(%arg0: i32) -> (i32, i32) {
    %c0_i32 = arith.constant 0 : i32
    %c0_i32_0 = arith.constant 0 : i32
    %c0_i32_1 = arith.constant 0 : i32
    return %c0_i32, %c0_i32_0 : i32, i32
  }
  func.func @transform_2(%arg0: i32) -> (i32, i32) {
    %c0_i32 = arith.constant 0 : i32
    %c0_i32_0 = arith.constant 0 : i32
    %c0_i32_1 = arith.constant 0 : i32
    return %c0_i32, %c0_i32_0 : i32, i32
  }
  func.func @transform_3(%arg0: i32) -> (i32, i32) {
    %c0_i32 = arith.constant 0 : i32
    %c0_i32_0 = arith.constant 0 : i32
    %c0_i32_1 = arith.constant 0 : i32
    return %c0_i32, %c0_i32_0 : i32, i32
  }
  func.func @transform_4(%arg0: i32) -> (i32, i32) {
    %c0_i32 = arith.constant 0 : i32
    %c0_i32_0 = arith.constant 0 : i32
    %c0_i32_1 = arith.constant 0 : i32
    return %c0_i32, %c0_i32_0 : i32, i32
  }
  func.func @transform_5(%arg0: i32) -> (i32, i32) {
    %c0_i32 = arith.constant 0 : i32
    %c0_i32_0 = arith.constant 0 : i32
    %c0_i32_1 = arith.constant 0 : i32
    return %c0_i32, %c0_i32_0 : i32, i32
  }
  func.func @transform_6(%arg0: i32) -> (i32, i32) {
    %c0_i32 = arith.constant 0 : i32
    %c0_i32_0 = arith.constant 0 : i32
    %c0_i32_1 = arith.constant 0 : i32
    return %c0_i32, %c0_i32_0 : i32, i32
  }
  func.func @transform_7(%arg0: i32) -> (i32, i32) {
    %c0_i32 = arith.constant 0 : i32
    %c0_i32_0 = arith.constant 0 : i32
    %c0_i32_1 = arith.constant 0 : i32
    return %c0_i32, %c0_i32_0 : i32, i32
  }
  func.func @transform_8(%arg0: i32) -> (i32, i32) {
    %c0_i32 = arith.constant 0 : i32
    %c0_i32_0 = arith.constant 0 : i32
    %c0_i32_1 = arith.constant 0 : i32
    return %c0_i32, %c0_i32_0 : i32, i32
  }
  func.func @transform_9(%arg0: i32) -> (i32, i32) {
    %c0_i32 = arith.constant 0 : i32
    %c0_i32_0 = arith.constant 0 : i32
    return %arg0, %c0_i32 : i32, i32
  }
}

</mosaic_0001>

<llo_original>
// kernel: fault_classifier.3
$region0: #{fault_classifier.3}
  #allocation0 [shape = 'u32[]', space=smem, size = 0x4, offset = 0x4, fixed_abs, tag = 'smem constant byte address 0x4 - core index']
  #allocation1 [shape = 'u32[72,128]{1,0:T(1,128)}', space=vmem, size = 0x9000, scoped, tag = 'internal scratch']
  %s0 = inlined_call_operand.vmem [shape: f32[20,6], index: 0, kind: input, shape index: {}]
  %s1 = inlined_call_operand.vmem [shape: f32[6,60], index: 1, kind: input, shape index: {}]
  %s2 = inlined_call_operand.vmem [shape: f32[1,60], index: 2, kind: input, shape index: {}]
  %s3 = inlined_call_operand.vmem [shape: f32[60,100], index: 3, kind: input, shape index: {}]
  %s4 = inlined_call_operand.vmem [shape: f32[1,100], index: 4, kind: input, shape index: {}]
  %s5 = inlined_call_operand.vmem [shape: f32[100,50], index: 5, kind: input, shape index: {}]
  %s6 = inlined_call_operand.vmem [shape: f32[1,50], index: 6, kind: input, shape index: {}]
  %s7 = inlined_call_operand.vmem [shape: f32[50,8], index: 7, kind: input, shape index: {}]
  %s8 = inlined_call_operand.vmem [shape: f32[1,8], index: 8, kind: input, shape index: {}]
  %s9 = inlined_call_operand.vmem [shape: f32[20,8], index: 9, kind: output, shape index: {}]
  %s10 = sld [smem:[#allocation0]]
  $region69: #{fault_classifier.3} parent=0
    _
  %s12 = ssub.s32 1, %s10
  %s13 = scalar_select 0, %s12, %s10
  loop: start=0, step=1, limit=5
  $region2: #{fault_classifier.3} parent=0 // loop_pre_header
    _
  $region3: #{fault_classifier.3} parent=0 // loop_header
    %s15 = sphi 0, %s19
    %p16 = scmp.ge.s32.totalorder %s15, 5
    %s25 = sphi 0, %s27
    %s28 = sphi 0, %s25
    %s29 = sphi 0, %s28
    %s45 = sphi 0, %s29
    %s49 = sphi 0, %s49
    %s51 = sphi 0, %s49
    %s52 = sphi 0, %s51
    %s66 = sphi 0, %s52
    %s70 = sphi 0, %s70
    %s72 = sphi 0, %s70
    %s73 = sphi 0, %s72
    %s87 = sphi 0, %s73
    %s91 = sphi 0, %s91
    %s93 = sphi 0, %s91
    %s94 = sphi 0, %s93
    %s108 = sphi 0, %s94
    %s112 = sphi 0, %s112
    %s114 = sphi 0, %s112
    %s115 = sphi 0, %s114
    %s129 = sphi 0, %s115
    %s133 = sphi 0, %s133
    %s135 = sphi 0, %s133
    %s136 = sphi 0, %s135
    %s150 = sphi 0, %s136
    %s154 = sphi 0, %s154
    %s156 = sphi 0, %s154
    %s157 = sphi 0, %s156
    %s171 = sphi 0, %s157
    %s175 = sphi 0, %s175
    %s177 = sphi 0, %s175
    %s178 = sphi 0, %s177
    %s192 = sphi 0, %s178
    %s196 = sphi 0, %s196
    %s198 = sphi 0, %s196
    %s199 = sphi 0, %s198
    %s213 = sphi 0, %s199
    %s219 = sphi 0, %s221
    %s222 = sphi 0, %s219
    %s223 = sphi 0, %s222
    %s239 = sphi 0, %s223
  $region4: #{fault_classifier.3} parent=0 // loop_header_branch
    %18 = sbr.rel (%p16) target = $region8
  $region5: #{fault_classifier.3} parent=0 // loop_body
    %s20 = ssub.s32 %s15, 1
    %s21 = ssub.s32 %s15, 2
    %s22 = sadd.s32 %s15, 1
    %s23 = ssub.s32 %s15, %s22
    %p24 = scmp.eq.s32.totalorder %s23, 0
    %s26 = sadd.s32 %s25, 1
    %s27 = scalar_select %p24, %s25, %s26
    %p30 = pneg %p24
    %p31 = scmp.eq.s32.totalorder %s15, 2
    %p32 = por %p30, %p31
    %p33 = scmp.ne.s32.totalorder %s25, %s28
    %p34 = scmp.eq.s32.totalorder %s15, 0
    %p35 = por %p33, %p34
    %p36 = scmp.ne.s32.totalorder %s25, %s28
    %p37 = scmp.eq.s32.totalorder %s20, 2
    %p38 = por %p36, %p37
    %p39 = scmp.ne.s32.totalorder %s28, %s29
    %p40 = scmp.eq.s32.totalorder %s20, 0
    %p41 = por %p39, %p40
    %p42 = scmp.ne.s32.totalorder %s28, %s29
    %p43 = scmp.eq.s32.totalorder %s21, 2
    %p44 = por %p42, %p43
    %p46 = scmp.ne.s32.totalorder %s29, %s45
    %p47 = scmp.eq.s32.totalorder %s21, 0
    %p48 = por %p46, %p47
    %s50 = sadd.s32 %s49, 1
    %p53 = scmp.eq.s32.totalorder %s15, 2
    %p54 = scmp.ne.s32.totalorder %s49, %s51
    %p55 = scmp.eq.s32.totalorder %s15, 0
    %p56 = por %p54, %p55
    %p57 = scmp.ne.s32.totalorder %s49, %s51
    %p58 = scmp.eq.s32.totalorder %s20, 2
    %p59 = por %p57, %p58
    %p60 = scmp.ne.s32.totalorder %s51, %s52
    %p61 = scmp.eq.s32.totalorder %s20, 0
    %p62 = por %p60, %p61
    %p63 = scmp.ne.s32.totalorder %s51, %s52
    %p64 = scmp.eq.s32.totalorder %s21, 2
    %p65 = por %p63, %p64
    %p67 = scmp.ne.s32.totalorder %s52, %s66
    %p68 = scmp.eq.s32.totalorder %s21, 0
    %p69 = por %p67, %p68
    %s71 = sadd.s32 %s70, 1
    %p74 = scmp.eq.s32.totalorder %s15, 2
    %p75 = scmp.ne.s32.totalorder %s70, %s72
    %p76 = scmp.eq.s32.totalorder %s15, 0
    %p77 = por %p75, %p76
    %p78 = scmp.ne.s32.totalorder %s70, %s72
    %p79 = scmp.eq.s32.totalorder %s20, 2
    %p80 = por %p78, %p79
    %p81 = scmp.ne.s32.totalorder %s72, %s73
    %p82 = scmp.eq.s32.totalorder %s20, 0
    %p83 = por %p81, %p82
    %p84 = scmp.ne.s32.totalorder %s72, %s73
    %p85 = scmp.eq.s32.totalorder %s21, 2
    %p86 = por %p84, %p85
    %p88 = scmp.ne.s32.totalorder %s73, %s87
    %p89 = scmp.eq.s32.totalorder %s21, 0
    %p90 = por %p88, %p89
    %s92 = sadd.s32 %s91, 1
    %p95 = scmp.eq.s32.totalorder %s15, 2
    %p96 = scmp.ne.s32.totalorder %s91, %s93
    %p97 = scmp.eq.s32.totalorder %s15, 0
    %p98 = por %p96, %p97
    %p99 = scmp.ne.s32.totalorder %s91, %s93
    %p100 = scmp.eq.s32.totalorder %s20, 2
    %p101 = por %p99, %p100
    %p102 = scmp.ne.s32.totalorder %s93, %s94
    %p103 = scmp.eq.s32.totalorder %s20, 0
    %p104 = por %p102, %p103
    %p105 = scmp.ne.s32.totalorder %s93, %s94
    %p106 = scmp.eq.s32.totalorder %s21, 2
    %p107 = por %p105, %p106
    %p109 = scmp.ne.s32.totalorder %s94, %s108
    %p110 = scmp.eq.s32.totalorder %s21, 0
    %p111 = por %p109, %p110
    %s113 = sadd.s32 %s112, 1
    %p116 = scmp.eq.s32.totalorder %s15, 2
    %p117 = scmp.ne.s32.totalorder %s112, %s114
    %p118 = scmp.eq.s32.totalorder %s15, 0
    %p119 = por %p117, %p118
    %p120 = scmp.ne.s32.totalorder %s112, %s114
    %p121 = scmp.eq.s32.totalorder %s20, 2
    %p122 = por %p120, %p121
    %p123 = scmp.ne.s32.totalorder %s114, %s115
    %p124 = scmp.eq.s32.totalorder %s20, 0
    %p125 = por %p123, %p124
    %p126 = scmp.ne.s32.totalorder %s114, %s115
    %p127 = scmp.eq.s32.totalorder %s21, 2
    %p128 = por %p126, %p127
    %p130 = scmp.ne.s32.totalorder %s115, %s129
    %p131 = scmp.eq.s32.totalorder %s21, 0
    %p132 = por %p130, %p131
    %s134 = sadd.s32 %s133, 1
    %p137 = scmp.eq.s32.totalorder %s15, 2
    %p138 = scmp.ne.s32.totalorder %s133, %s135
    %p139 = scmp.eq.s32.totalorder %s15, 0
    %p140 = por %p138, %p139
    %p141 = scmp.ne.s32.totalorder %s133, %s135
    %p142 = scmp.eq.s32.totalorder %s20, 2
    %p143 = por %p141, %p142
    %p144 = scmp.ne.s32.totalorder %s135, %s136
    %p145 = scmp.eq.s32.totalorder %s20, 0
    %p146 = por %p144, %p145
    %p147 = scmp.ne.s32.totalorder %s135, %s136
    %p148 = scmp.eq.s32.totalorder %s21, 2
    %p149 = por %p147, %p148
    %p151 = scmp.ne.s32.totalorder %s136, %s150
    %p152 = scmp.eq.s32.totalorder %s21, 0
    %p153 = por %p151, %p152
    %s155 = sadd.s32 %s154, 1
    %p158 = scmp.eq.s32.totalorder %s15, 2
    %p159 = scmp.ne.s32.totalorder %s154, %s156
    %p160 = scmp.eq.s32.totalorder %s15, 0
    %p161 = por %p159, %p160
    %p162 = scmp.ne.s32.totalorder %s154, %s156
    %p163 = scmp.eq.s32.totalorder %s20, 2
    %p164 = por %p162, %p163
    %p165 = scmp.ne.s32.totalorder %s156, %s157
    %p166 = scmp.eq.s32.totalorder %s20, 0
    %p167 = por %p165, %p166
    %p168 = scmp.ne.s32.totalorder %s156, %s157
    %p169 = scmp.eq.s32.totalorder %s21, 2
    %p170 = por %p168, %p169
    %p172 = scmp.ne.s32.totalorder %s157, %s171
    %p173 = scmp.eq.s32.totalorder %s21, 0
    %p174 = por %p172, %p173
    %s176 = sadd.s32 %s175, 1
    %p179 = scmp.eq.s32.totalorder %s15, 2
    %p180 = scmp.ne.s32.totalorder %s175, %s177
    %p181 = scmp.eq.s32.totalorder %s15, 0
    %p182 = por %p180, %p181
    %p183 = scmp.ne.s32.totalorder %s175, %s177
    %p184 = scmp.eq.s32.totalorder %s20, 2
    %p185 = por %p183, %p184
    %p186 = scmp.ne.s32.totalorder %s177, %s178
    %p187 = scmp.eq.s32.totalorder %s20, 0
    %p188 = por %p186, %p187
    %p189 = scmp.ne.s32.totalorder %s177, %s178
    %p190 = scmp.eq.s32.totalorder %s21, 2
    %p191 = por %p189, %p190
    %p193 = scmp.ne.s32.totalorder %s178, %s192
    %p194 = scmp.eq.s32.totalorder %s21, 0
    %p195 = por %p193, %p194
    %s197 = sadd.s32 %s196, 1
    %p200 = scmp.eq.s32.totalorder %s15, 2
    %p201 = scmp.ne.s32.totalorder %s196, %s198
    %p202 = scmp.eq.s32.totalorder %s15, 0
    %p203 = por %p201, %p202
    %p204 = scmp.ne.s32.totalorder %s196, %s198
    %p205 = scmp.eq.s32.totalorder %s20, 2
    %p206 = por %p204, %p205
    %p207 = scmp.ne.s32.totalorder %s198, %s199
    %p208 = scmp.eq.s32.totalorder %s20, 0
    %p209 = por %p207, %p208
    %p210 = scmp.ne.s32.totalorder %s198, %s199
    %p211 = scmp.eq.s32.totalorder %s21, 2
    %p212 = por %p210, %p211
    %p214 = scmp.ne.s32.totalorder %s199, %s213
    %p215 = scmp.eq.s32.totalorder %s21, 0
    %p216 = por %p214, %p215
    %s217 = ssub.s32 %s15, %s22
    %p218 = scmp.eq.s32.totalorder %s217, 0
    %s220 = sadd.s32 %s219, 1
    %s221 = scalar_select %p218, %s219, %s220
    %p224 = pneg %p218
    %p225 = scmp.eq.s32.totalorder %s15, 2
    %p226 = por %p224, %p225
    %p227 = scmp.ne.s32.totalorder %s219, %s222
    %p228 = scmp.eq.s32.totalorder %s15, 0
    %p229 = por %p227, %p228
    %p230 = scmp.ne.s32.totalorder %s219, %s222
    %p231 = scmp.eq.s32.totalorder %s20, 2
    %p232 = por %p230, %p231
    %p233 = scmp.ne.s32.totalorder %s222, %s223
    %p234 = scmp.eq.s32.totalorder %s20, 0
    %p235 = por %p233, %p234
    %p236 = scmp.ne.s32.totalorder %s222, %s223
    %p237 = scmp.eq.s32.totalorder %s21, 2
    %p238 = por %p236, %p237
    %p240 = scmp.ne.s32.totalorder %s223, %s239
    %p241 = scmp.eq.s32.totalorder %s21, 0
    %p242 = por %p240, %p241
    %p243 = scmp.le.s32.totalorder 1, %s15
    %p244 = scmp.lt.s32.totalorder %s15, 4
    %p245 = pnand %p243, %p244
    %p246 = pneg %p245
    // Predicated region
    $region9: #{fault_classifier.3} parent=5 // pred_check
      _
    $region10: #{fault_classifier.3} parent=5 // pred_check_branch
      %248 = sbr.rel (%p245) target = $region12
    $region11: #{fault_classifier.3} parent=5 // pred_region
      %s249 = ssub.s32 %s15, 1
      // Predicated region
      $region13: #{fault_classifier.3} parent=11 // pred_check
        %p250 = pneg %p62
      $region14: #{fault_classifier.3} parent=11 // pred_check_branch
        %252 = sbr.rel (%p250) target = $region16
      $region15: #{fault_classifier.3} parent=11 // pred_region
        _
      $region16: #{fault_classifier.3} parent=11 // pred_fallthru
        _
      // Predicated region
      $region17: #{fault_classifier.3} parent=11 // pred_check
        %p253 = pneg %p83
      $region18: #{fault_classifier.3} parent=11 // pred_check_branch
        %255 = sbr.rel (%p253) target = $region20
      $region19: #{fault_classifier.3} parent=11 // pred_region
        _
      $region20: #{fault_classifier.3} parent=11 // pred_fallthru
        _
      // Predicated region
      $region21: #{fault_classifier.3} parent=11 // pred_check
        %p256 = pneg %p104
      $region22: #{fault_classifier.3} parent=11 // pred_check_branch
        %258 = sbr.rel (%p256) target = $region24
      $region23: #{fault_classifier.3} parent=11 // pred_region
        _
      $region24: #{fault_classifier.3} parent=11 // pred_fallthru
        _
      // Predicated region
      $region25: #{fault_classifier.3} parent=11 // pred_check
        %p259 = pneg %p125
      $region26: #{fault_classifier.3} parent=11 // pred_check_branch
        %261 = sbr.rel (%p259) target = $region28
      $region27: #{fault_classifier.3} parent=11 // pred_region
        _
      $region28: #{fault_classifier.3} parent=11 // pred_fallthru
        _
      // Predicated region
      $region29: #{fault_classifier.3} parent=11 // pred_check
        %p262 = pneg %p146
      $region30: #{fault_classifier.3} parent=11 // pred_check_branch
        %264 = sbr.rel (%p262) target = $region32
      $region31: #{fault_classifier.3} parent=11 // pred_region
        _
      $region32: #{fault_classifier.3} parent=11 // pred_fallthru
        _
      // Predicated region
      $region33: #{fault_classifier.3} parent=11 // pred_check
        %p265 = pneg %p167
      $region34: #{fault_classifier.3} parent=11 // pred_check_branch
        %267 = sbr.rel (%p265) target = $region36
      $region35: #{fault_classifier.3} parent=11 // pred_region
        _
      $region36: #{fault_classifier.3} parent=11 // pred_fallthru
        _
      // Predicated region
      $region37: #{fault_classifier.3} parent=11 // pred_check
        %p268 = pneg %p188
      $region38: #{fault_classifier.3} parent=11 // pred_check_branch
        %270 = sbr.rel (%p268) target = $region40
      $region39: #{fault_classifier.3} parent=11 // pred_region
        _
      $region40: #{fault_classifier.3} parent=11 // pred_fallthru
        _
      // Predicated region
      $region41: #{fault_classifier.3} parent=11 // pred_check
        %p271 = pneg %p209
      $region42: #{fault_classifier.3} parent=11 // pred_check_branch
        %273 = sbr.rel (%p271) target = $region44
      $region43: #{fault_classifier.3} parent=11 // pred_region
        _
      $region44: #{fault_classifier.3} parent=11 // pred_fallthru
        _
    $region12: #{fault_classifier.3} parent=5 // pred_fallthru
      _
    %p274 = scmp.lt.s32.totalorder %s15, 3
    // Predicated region
    $region45: #{fault_classifier.3} parent=5 // pred_check
      %p275 = pneg %p274
    $region46: #{fault_classifier.3} parent=5 // pred_check_branch
      %277 = sbr.rel (%p275) target = $region48
    $region47: #{fault_classifier.3} parent=5 // pred_region
      // Predicated region
      $region49: #{fault_classifier.3} parent=47 // pred_check
        %p278 = pneg %p35
      $region50: #{fault_classifier.3} parent=47 // pred_check_branch
        %280 = sbr.rel (%p278) target = $region52
      $region51: #{fault_classifier.3} parent=47 // pred_region
        %p281 = scmp.lt.s32.totalorder %s15, 2
        %s282 = scalar_select %p281, %s15, 2
        %s283 = smul.addr %s282, 8
        %s284 = scalar_lea.vmem %s0, %s283
      $region52: #{fault_classifier.3} parent=47 // pred_fallthru
        _
    $region48: #{fault_classifier.3} parent=5 // pred_fallthru
      _
    %p285 = scmp.le.s32.totalorder 1, %s15
    %p286 = scmp.lt.s32.totalorder %s15, 4
    %p287 = pnand %p285, %p286
    %p288 = pneg %p287
    // Predicated region
    $region53: #{fault_classifier.3} parent=5 // pred_check
      _
    $region54: #{fault_classifier.3} parent=5 // pred_check_branch
      %290 = sbr.rel (%p287) target = $region56
    $region55: #{fault_classifier.3} parent=5 // pred_region
      %s291 = ssub.s32 %s15, 1
      %p292 = scmp.lt.s32.totalorder %s20, 2
      %s293 = scalar_select %p292, %s20, 2
      %s294 = smul.addr %s293, 8
      %s295 = scalar_lea.vmem %s0, %s294
      %p296 = pneg %p41
      %p297 = pneg %p38
      %p298 = pneg %p62
      %p299 = pneg %p59
      %p300 = pneg %p83
      %p301 = pneg %p80
      %p302 = pneg %p104
      %p303 = pneg %p101
      %p304 = pneg %p125
      %p305 = pneg %p122
      %p306 = pneg %p146
      %p307 = pneg %p143
      %p308 = pneg %p167
      %p309 = pneg %p164
      %p310 = pneg %p188
      %p311 = pneg %p185
      %p312 = pneg %p209
      %p313 = pneg %p206
      %p314 = pneg %p235
      %p315 = pneg %p232
      %p316 = scmp.lt.s32.totalorder %s20, 2
      %s317 = scalar_select %p316, %s20, 2
      %s318 = smul.addr %s317, 8
      %s319 = scalar_lea.vmem %s9, %s318
      %p320 = scmp.lt.s32.totalorder %s20, 2
      %s321 = scalar_select %p320, %s20, 2
      %s322 = smul.addr %s321, 8
      %s323 = scalar_lea.vmem %s0, %s322
      %p324 = scmp.lt.s32.totalorder %s20, 2
      %s325 = scalar_select %p324, %s20, 2
      %s326 = smul.addr %s325, 8
      %s327 = scalar_lea.vmem %s9, %s326
      %v328 = vld [vmem:[%s323] sm:$0xff]
      %v329 = vld [vmem:[%s1] sm:$0x3f]
      %v330 = vld [vmem:[%s2] sm:$0x1]
      %v332 = vperm.slane %v330, 0
      %vm334 = vcmask 48128
      %v336 = vsel %vm334, %v328, 0
      %vm338 = vcmask 1045504
      %v340 = vsel %vm338, %v329, 0
      %342 = vmatpush.msra.mxu0 0.0
      %343 = vmatpush.msra.mxu0 0.0
      %344 = vmatpush.msra.mxu0 0.0
      %345 = vmatpush.msra.mxu0 0.0
      %346 = vmatpush.msra.mxu0 0.0
      %347 = vmatpush.msra.mxu0 0.0
      %348 = vmatpush.msra.mxu0 0.0
      %349 = vmatpush.msra.mxu0 0.0
      %350 = vmatpush.msra.mxu0 0.0
      %351 = vmatpush.msra.mxu0 0.0
      %352 = vmatpush.msra.mxu0 0.0
      %353 = vmatpush.msra.mxu0 0.0
      %354 = vmatpush.msra.mxu0 0.0
      %355 = vmatpush.msra.mxu0 0.0
      %356 = vmatpush.msra.mxu0 0.0
      %357 = vmatpush.msra.mxu0 %v340
      %358 = vmatmul.f32.gmra.mxu0 %v336
      %v359 = vpop.f32.mrf.mxu0
      %v360 = vadd.f32 %v332, %v359
      %361 = vdwg.mxu0
      %v362 = vmax.f32 %v360, 0.0
      %v363 = vld [vmem:[%s3] sm:$0xff]
      %v364 = vld [vmem:[%s3 + $0x8] sm:$0xff]
      %v365 = vld [vmem:[%s3 + $0x10] sm:$0xff]
      %v366 = vld [vmem:[%s3 + $0x18] sm:$0xff]
      %v367 = vld [vmem:[%s3 + $0x20] sm:$0xff]
      %v368 = vld [vmem:[%s3 + $0x28] sm:$0xff]
      %v369 = vld [vmem:[%s3 + $0x30] sm:$0xff]
      %v370 = vld [vmem:[%s3 + $0x38] sm:$0xf]
      %v371 = vld [vmem:[%s4] sm:$0x1]
      %v373 = vperm.slane %v371, 0
      %vm375 = vcmask 490496
      %v377 = vsel %vm375, %v362, 0
      %vm379 = vcmask 1043456
      %v381 = vsel %vm379, %v370, 0
      %383 = vmatpush.msra.mxu0 0.0
      %384 = vmatpush.msra.mxu0 0.0
      %385 = vmatpush.msra.mxu0 0.0
      %386 = vmatpush.msra.mxu0 0.0
      %387 = vmatpush.msra.mxu0 0.0
      %388 = vmatpush.msra.mxu0 0.0
      %389 = vmatpush.msra.mxu0 0.0
      %390 = vmatpush.msra.mxu0 0.0
      %391 = vmatpush.msra.mxu0 %v381
      %392 = vmatpush.msra.mxu0 %v369
      %393 = vmatpush.msra.mxu0 %v368
      %394 = vmatpush.msra.mxu0 %v367
      %395 = vmatpush.msra.mxu0 %v366
      %396 = vmatpush.msra.mxu0 %v365
      %397 = vmatpush.msra.mxu0 %v364
      %398 = vmatpush.msra.mxu0 %v363
      %399 = vmatmul.f32.gmra.mxu0 %v377
      %v400 = vpop.f32.mrf.mxu0
      %v401 = vadd.f32 %v373, %v400
      %402 = vdwg.mxu0
      %v403 = vmax.f32 %v401, 0.0
      %v404 = vld [vmem:[%s5] sm:$0xff]
      %v405 = vld [vmem:[%s5 + $0x8] sm:$0xff]
      %v406 = vld [vmem:[%s5 + $0x10] sm:$0xff]
      %v407 = vld [vmem:[%s5 + $0x18] sm:$0xff]
      %v408 = vld [vmem:[%s5 + $0x20] sm:$0xff]
      %v409 = vld [vmem:[%s5 + $0x28] sm:$0xff]
      %v410 = vld [vmem:[%s5 + $0x30] sm:$0xff]
      %v411 = vld [vmem:[%s5 + $0x38] sm:$0xff]
      %v412 = vld [vmem:[%s5 + $0x40] sm:$0xff]
      %v413 = vld [vmem:[%s5 + $0x48] sm:$0xff]
      %v414 = vld [vmem:[%s5 + $0x50] sm:$0xff]
      %v415 = vld [vmem:[%s5 + $0x58] sm:$0xff]
      %v416 = vld [vmem:[%s5 + $0x60] sm:$0xf]
      %v417 = vld [vmem:[%s6] sm:$0x1]
      %v419 = vperm.slane %v417, 0
      %vm421 = vcmask 818176
      %v423 = vsel %vm421, %v403, 0
      %v426 = vsel %vm379, %v416, 0
      %428 = vmatpush.msra.mxu0 0.0
      %429 = vmatpush.msra.mxu0 0.0
      %430 = vmatpush.msra.mxu0 0.0
      %431 = vmatpush.msra.mxu0 %v426
      %432 = vmatpush.msra.mxu0 %v415
      %433 = vmatpush.msra.mxu0 %v414
      %434 = vmatpush.msra.mxu0 %v413
      %435 = vmatpush.msra.mxu0 %v412
      %436 = vmatpush.msra.mxu0 %v411
      %437 = vmatpush.msra.mxu0 %v410
      %438 = vmatpush.msra.mxu0 %v409
      %439 = vmatpush.msra.mxu0 %v408
      %440 = vmatpush.msra.mxu0 %v407
      %441 = vmatpush.msra.mxu0 %v406
      %442 = vmatpush.msra.mxu0 %v405
      %443 = vmatpush.msra.mxu0 %v404
      %444 = vmatmul.f32.gmra.mxu0 %v423
      %v445 = vpop.f32.mrf.mxu0
      %v446 = vadd.f32 %v419, %v445
      %447 = vdwg.mxu0
      %v448 = vmax.f32 %v446, 0.0
      %v449 = vld [vmem:[%s7] sm:$0xff]
      %v450 = vld [vmem:[%s7 + $0x8] sm:$0xff]
      %v451 = vld [vmem:[%s7 + $0x10] sm:$0xff]
      %v452 = vld [vmem:[%s7 + $0x18] sm:$0xff]
      %v453 = vld [vmem:[%s7 + $0x20] sm:$0xff]
      %v454 = vld [vmem:[%s7 + $0x28] sm:$0xff]
      %v455 = vld [vmem:[%s7 + $0x30] sm:$0x3]
      %v456 = vld [vmem:[%s8] sm:$0x1]
      %v458 = vperm.slane %v456, 0
      %vm460 = vcmask 408576
      %v462 = vsel %vm460, %v448, 0
      %vm464 = vcmask 1041408
      %v466 = vsel %vm464, %v455, 0
      %468 = vmatpush.msra.mxu0 0.0
      %469 = vmatpush.msra.mxu0 0.0
      %470 = vmatpush.msra.mxu0 0.0
      %471 = vmatpush.msra.mxu0 0.0
      %472 = vmatpush.msra.mxu0 0.0
      %473 = vmatpush.msra.mxu0 0.0
      %474 = vmatpush.msra.mxu0 0.0
      %475 = vmatpush.msra.mxu0 0.0
      %476 = vmatpush.msra.mxu0 0.0
      %477 = vmatpush.msra.mxu0 %v466
      %478 = vmatpush.msra.mxu0 %v454
      %479 = vmatpush.msra.mxu0 %v453
      %480 = vmatpush.msra.mxu0 %v452
      %481 = vmatpush.msra.mxu0 %v451
      %482 = vmatpush.msra.mxu0 %v450
      %483 = vmatpush.msra.mxu0 %v449
      %484 = vmatmul.f32.gmra.mxu0 %v462
      %v485 = vpop.f32.mrf.mxu0
      %v486 = vadd.f32 %v458, %v485
      %487 = vdwg.mxu0
      %vm488 = vcmask 64512
      %v489 = vsel %vm488, %v486, -inf
      %490 = vmax.xlane.f32.xlu0 %v489
      %v491 = vpop.xlane.xlu0 %490
      %v492 = vsub.f32 %v486, %v491
      %v493 = vmul.f32 %v492, 1.442695
      %v494 = vpow.pop %v493
      %v495 = vsel %vm488, %v494, 0.0
      %496 = vadd.xlane.f32.xlu0 %v495
      %v497 = vpop.xlane.xlu0 %496
      %v498 = vrcp.pop %v497
      %v499 = vmul.f32 %v497, %v498
      %v500 = vsub.f32 1.0, %v499
      %v501 = vmul.f32 %v498, %v500
      %v502 = vadd.f32 %v498, %v501
      %vm503 = vweird.f32 %v497
      %vm504 = vweird.f32 %v498
      %vm505 = vmor %vm503, %vm504
      %v506 = vsel %vm505, %v498, %v502
      %v507 = vand.u32 2147483647, %v497
      %vm508 = vcmp.eq.f32.partialorder %v507, 8.507059e+37
      %v509 = vand.u32 %v497, 2147483648
      %v510 = vor.u32 1.1754944e-38, %v509
      %v511 = vsel %vm508, %v510, %v506
      %v512 = vmul.f32 %v494, %v511
      %513 = vst.msk [vmem:[%s327] sm:$0xff] %vm488, %v512
      %p514 = scmp.lt.s32.totalorder %s20, 2
      %s515 = scalar_select %p514, %s20, 2
      %s516 = smul.addr %s515, 8
      %s517 = scalar_lea.vmem %s9, %s516
      // Predicated region
      $region57: #{fault_classifier.3} parent=55 // pred_check
        %p518 = pneg %p232
      $region58: #{fault_classifier.3} parent=55 // pred_check_branch
        %520 = sbr.rel (%p518) target = $region60
      $region59: #{fault_classifier.3} parent=55 // pred_region
        _
      $region60: #{fault_classifier.3} parent=55 // pred_fallthru
        _
    $region56: #{fault_classifier.3} parent=5 // pred_fallthru
      _
    %p521 = scmp.le.s32.totalorder 2, %s15
    // Predicated region
    $region61: #{fault_classifier.3} parent=5 // pred_check
      %p522 = pneg %p521
    $region62: #{fault_classifier.3} parent=5 // pred_check_branch
      %524 = sbr.rel (%p522) target = $region64
    $region63: #{fault_classifier.3} parent=5 // pred_region
      %s525 = ssub.s32 %s15, 2
      // Predicated region
      $region65: #{fault_classifier.3} parent=63 // pred_check
        %p526 = pneg %p238
      $region66: #{fault_classifier.3} parent=63 // pred_check_branch
        %528 = sbr.rel (%p526) target = $region68
      $region67: #{fault_classifier.3} parent=63 // pred_region
        %p529 = scmp.lt.s32.totalorder %s21, 2
        %s530 = scalar_select %p529, %s21, 2
        %s531 = smul.addr %s530, 8
        %s532 = scalar_lea.vmem %s9, %s531
      $region68: #{fault_classifier.3} parent=63 // pred_fallthru
        _
    $region64: #{fault_classifier.3} parent=5 // pred_fallthru
      _
  $region6: #{fault_classifier.3} parent=0 // loop_footer
    %s19 = sadd.s32 1, %s15
  $region7: #{fault_classifier.3} parent=0 // loop_footer_branch
    %14 = sbr.rel target = $region3
  $region8: #{fault_classifier.3} parent=0 // loop_exit
    _

// kernel: fault_classifier.2
$region0: #{fault_classifier.2}
  #allocation0 [shape = 'u32[]', space=smem, size = 0x4, offset = 0x4, fixed_abs, tag = 'smem constant byte address 0x4 - core index']
  #allocation1 [shape = 'u32[72,128]{1,0:T(1,128)}', space=vmem, size = 0x9000, scoped, tag = 'internal scratch']
  %s0 = inlined_call_operand.vmem [shape: f32[20,6], index: 0, kind: input, shape index: {}]
  %s1 = inlined_call_operand.vmem [shape: f32[6,60], index: 1, kind: input, shape index: {}]
  %s2 = inlined_call_operand.vmem [shape: f32[1,60], index: 2, kind: input, shape index: {}]
  %s3 = inlined_call_operand.vmem [shape: f32[3,2,60], index: 3, kind: output, shape index: {}]
  %s4 = sld [smem:[#allocation0]]
  $region45: #{fault_classifier.2} parent=0
    _
  %s6 = ssub.s32 1, %s4
  %s7 = scalar_select 0, %s6, %s4
  loop: start=0, step=1, limit=5
  $region2: #{fault_classifier.2} parent=0 // loop_pre_header
    _
  $region3: #{fault_classifier.2} parent=0 // loop_header
    %s9 = sphi 0, %s13
    %p10 = scmp.ge.s32.totalorder %s9, 5
    %s19 = sphi 0, %s21
    %s22 = sphi 0, %s19
    %s23 = sphi 0, %s22
    %s39 = sphi 0, %s23
    %s43 = sphi 0, %s43
    %s45 = sphi 0, %s43
    %s46 = sphi 0, %s45
    %s60 = sphi 0, %s46
    %s64 = sphi 0, %s64
    %s66 = sphi 0, %s64
    %s67 = sphi 0, %s66
    %s81 = sphi 0, %s67
    %s87 = sphi 0, %s89
    %s90 = sphi 0, %s87
    %s91 = sphi 0, %s90
    %s107 = sphi 0, %s91
  $region4: #{fault_classifier.2} parent=0 // loop_header_branch
    %12 = sbr.rel (%p10) target = $region8
  $region5: #{fault_classifier.2} parent=0 // loop_body
    %s14 = ssub.s32 %s9, 1
    %s15 = ssub.s32 %s9, 2
    %s16 = sadd.s32 %s9, 1
    %s17 = ssub.s32 %s9, %s16
    %p18 = scmp.eq.s32.totalorder %s17, 0
    %s20 = sadd.s32 %s19, 1
    %s21 = scalar_select %p18, %s19, %s20
    %p24 = pneg %p18
    %p25 = scmp.eq.s32.totalorder %s9, 2
    %p26 = por %p24, %p25
    %p27 = scmp.ne.s32.totalorder %s19, %s22
    %p28 = scmp.eq.s32.totalorder %s9, 0
    %p29 = por %p27, %p28
    %p30 = scmp.ne.s32.totalorder %s19, %s22
    %p31 = scmp.eq.s32.totalorder %s14, 2
    %p32 = por %p30, %p31
    %p33 = scmp.ne.s32.totalorder %s22, %s23
    %p34 = scmp.eq.s32.totalorder %s14, 0
    %p35 = por %p33, %p34
    %p36 = scmp.ne.s32.totalorder %s22, %s23
    %p37 = scmp.eq.s32.totalorder %s15, 2
    %p38 = por %p36, %p37
    %p40 = scmp.ne.s32.totalorder %s23, %s39
    %p41 = scmp.eq.s32.totalorder %s15, 0
    %p42 = por %p40, %p41
    %s44 = sadd.s32 %s43, 1
    %p47 = scmp.eq.s32.totalorder %s9, 2
    %p48 = scmp.ne.s32.totalorder %s43, %s45
    %p49 = scmp.eq.s32.totalorder %s9, 0
    %p50 = por %p48, %p49
    %p51 = scmp.ne.s32.totalorder %s43, %s45
    %p52 = scmp.eq.s32.totalorder %s14, 2
    %p53 = por %p51, %p52
    %p54 = scmp.ne.s32.totalorder %s45, %s46
    %p55 = scmp.eq.s32.totalorder %s14, 0
    %p56 = por %p54, %p55
    %p57 = scmp.ne.s32.totalorder %s45, %s46
    %p58 = scmp.eq.s32.totalorder %s15, 2
    %p59 = por %p57, %p58
    %p61 = scmp.ne.s32.totalorder %s46, %s60
    %p62 = scmp.eq.s32.totalorder %s15, 0
    %p63 = por %p61, %p62
    %s65 = sadd.s32 %s64, 1
    %p68 = scmp.eq.s32.totalorder %s9, 2
    %p69 = scmp.ne.s32.totalorder %s64, %s66
    %p70 = scmp.eq.s32.totalorder %s9, 0
    %p71 = por %p69, %p70
    %p72 = scmp.ne.s32.totalorder %s64, %s66
    %p73 = scmp.eq.s32.totalorder %s14, 2
    %p74 = por %p72, %p73
    %p75 = scmp.ne.s32.totalorder %s66, %s67
    %p76 = scmp.eq.s32.totalorder %s14, 0
    %p77 = por %p75, %p76
    %p78 = scmp.ne.s32.totalorder %s66, %s67
    %p79 = scmp.eq.s32.totalorder %s15, 2
    %p80 = por %p78, %p79
    %p82 = scmp.ne.s32.totalorder %s67, %s81
    %p83 = scmp.eq.s32.totalorder %s15, 0
    %p84 = por %p82, %p83
    %s85 = ssub.s32 %s9, %s16
    %p86 = scmp.eq.s32.totalorder %s85, 0
    %s88 = sadd.s32 %s87, 1
    %s89 = scalar_select %p86, %s87, %s88
    %p92 = pneg %p86
    %p93 = scmp.eq.s32.totalorder %s9, 2
    %p94 = por %p92, %p93
    %p95 = scmp.ne.s32.totalorder %s87, %s90
    %p96 = scmp.eq.s32.totalorder %s9, 0
    %p97 = por %p95, %p96
    %p98 = scmp.ne.s32.totalorder %s87, %s90
    %p99 = scmp.eq.s32.totalorder %s14, 2
    %p100 = por %p98, %p99
    %p101 = scmp.ne.s32.totalorder %s90, %s91
    %p102 = scmp.eq.s32.totalorder %s14, 0
    %p103 = por %p101, %p102
    %p104 = scmp.ne.s32.totalorder %s90, %s91
    %p105 = scmp.eq.s32.totalorder %s15, 2
    %p106 = por %p104, %p105
    %p108 = scmp.ne.s32.totalorder %s91, %s107
    %p109 = scmp.eq.s32.totalorder %s15, 0
    %p110 = por %p108, %p109
    %p111 = scmp.le.s32.totalorder 1, %s9
    %p112 = scmp.lt.s32.totalorder %s9, 4
    %p113 = pnand %p111, %p112
    %p114 = pneg %p113
    // Predicated region
    $region9: #{fault_classifier.2} parent=5 // pred_check
      _
    $region10: #{fault_classifier.2} parent=5 // pred_check_branch
      %116 = sbr.rel (%p113) target = $region12
    $region11: #{fault_classifier.2} parent=5 // pred_region
      %s117 = ssub.s32 %s9, 1
      // Predicated region
      $region13: #{fault_classifier.2} parent=11 // pred_check
        %p118 = pneg %p56
      $region14: #{fault_classifier.2} parent=11 // pred_check_branch
        %120 = sbr.rel (%p118) target = $region16
      $region15: #{fault_classifier.2} parent=11 // pred_region
        _
      $region16: #{fault_classifier.2} parent=11 // pred_fallthru
        _
      // Predicated region
      $region17: #{fault_classifier.2} parent=11 // pred_check
        %p121 = pneg %p77
      $region18: #{fault_classifier.2} parent=11 // pred_check_branch
        %123 = sbr.rel (%p121) target = $region20
      $region19: #{fault_classifier.2} parent=11 // pred_region
        _
      $region20: #{fault_classifier.2} parent=11 // pred_fallthru
        _
    $region12: #{fault_classifier.2} parent=5 // pred_fallthru
      _
    %p124 = scmp.lt.s32.totalorder %s9, 3
    // Predicated region
    $region21: #{fault_classifier.2} parent=5 // pred_check
      %p125 = pneg %p124
    $region22: #{fault_classifier.2} parent=5 // pred_check_branch
      %127 = sbr.rel (%p125) target = $region24
    $region23: #{fault_classifier.2} parent=5 // pred_region
      // Predicated region
      $region25: #{fault_classifier.2} parent=23 // pred_check
        %p128 = pneg %p29
      $region26: #{fault_classifier.2} parent=23 // pred_check_branch
        %130 = sbr.rel (%p128) target = $region28
      $region27: #{fault_classifier.2} parent=23 // pred_region
        %p131 = scmp.lt.s32.totalorder %s9, 2
        %s132 = scalar_select %p131, %s9, 2
        %s133 = smul.addr %s132, 8
        %s134 = scalar_lea.vmem %s0, %s133
      $region28: #{fault_classifier.2} parent=23 // pred_fallthru
        _
    $region24: #{fault_classifier.2} parent=5 // pred_fallthru
      _
    %p135 = scmp.le.s32.totalorder 1, %s9
    %p136 = scmp.lt.s32.totalorder %s9, 4
    %p137 = pnand %p135, %p136
    %p138 = pneg %p137
    // Predicated region
    $region29: #{fault_classifier.2} parent=5 // pred_check
      _
    $region30: #{fault_classifier.2} parent=5 // pred_check_branch
      %140 = sbr.rel (%p137) target = $region32
    $region31: #{fault_classifier.2} parent=5 // pred_region
      %s141 = ssub.s32 %s9, 1
      %p142 = scmp.lt.s32.totalorder %s14, 2
      %s143 = scalar_select %p142, %s14, 2
      %s144 = smul.addr %s143, 8
      %s145 = scalar_lea.vmem %s0, %s144
      %p146 = pneg %p35
      %p147 = pneg %p32
      %p148 = pneg %p56
      %p149 = pneg %p53
      %p150 = pneg %p77
      %p151 = pneg %p74
      %p152 = pneg %p103
      %p153 = pneg %p100
      %p154 = scmp.lt.s32.totalorder %s14, 2
      %s155 = scalar_select %p154, %s14, 2
      %s156 = smul.addr %s155, 2
      %s157 = scalar_lea.vmem %s3, %s156
      %p158 = scmp.lt.s32.totalorder %s14, 2
      %s159 = scalar_select %p158, %s14, 2
      %s160 = smul.addr %s159, 8
      %s161 = scalar_lea.vmem %s0, %s160
      %p162 = scmp.lt.s32.totalorder %s14, 2
      %s163 = scalar_select %p162, %s14, 2
      %s164 = smul.addr %s163, 2
      %s165 = scalar_lea.vmem %s3, %s164
      %v166 = vld [vmem:[%s161] sm:$0xff]
      %v167 = vld [vmem:[%s1] sm:$0x3f]
      %v168 = vld [vmem:[%s2] sm:$0x1]
      %v170 = vperm.slane %v168, 0
      %vm172 = vcmask 48128
      %v174 = vsel %vm172, %v166, 0
      %vm176 = vcmask 1045504
      %v178 = vsel %vm176, %v167, 0
      %180 = vmatpush.msra.mxu0 0.0
      %181 = vmatpush.msra.mxu0 0.0
      %182 = vmatpush.msra.mxu0 0.0
      %183 = vmatpush.msra.mxu0 0.0
      %184 = vmatpush.msra.mxu0 0.0
      %185 = vmatpush.msra.mxu0 0.0
      %186 = vmatpush.msra.mxu0 0.0
      %187 = vmatpush.msra.mxu0 0.0
      %188 = vmatpush.msra.mxu0 0.0
      %189 = vmatpush.msra.mxu0 0.0
      %190 = vmatpush.msra.mxu0 0.0
      %191 = vmatpush.msra.mxu0 0.0
      %192 = vmatpush.msra.mxu0 0.0
      %193 = vmatpush.msra.mxu0 0.0
      %194 = vmatpush.msra.mxu0 0.0
      %195 = vmatpush.msra.mxu0 %v178
      %196 = vmatmul.f32.gmra.mxu0 %v174
      %v197 = vpop.f32.mrf.mxu0
      %v198 = vadd.f32 %v170, %v197
      %199 = vdwg.mxu0
      %v200 = vmax.f32 %v198, 0.0
      %v201 = vlaneseq
      %v202 = vshrl.u32 %v201, 7
      %s203 = smul.u32 %s14, 8
      %v204 = vstv %s203
      %v205 = vadd.s32 %v202, %v204
      %vm206 = vcmp.lt.s32.totalorder %v205, 20
      %v207 = vsel %vm206, 1, 0
      %vm208 = vcmp.eq.s32.totalorder %v207, 1
      %v209 = vsel %vm208, %v200, 0.0
      %vm210 = vcmask 490496
      %v211 = vsel %vm210, %v209, 0.0
      %v212 = vrot.slane %v211, 4
      %v213 = vadd.f32 %v211, %v212
      %v214 = vrot.slane %v213, 2
      %v215 = vadd.f32 %v213, %v214
      %v216 = vrot.slane %v215, 1
      %v217 = vadd.f32 %v215, %v216
      %v218 = vmul.f32 %v209, %v209
      %v219 = vsel %vm210, %v218, 0.0
      %v220 = vrot.slane %v219, 4
      %v221 = vadd.f32 %v219, %v220
      %v222 = vrot.slane %v221, 2
      %v223 = vadd.f32 %v221, %v222
      %v224 = vrot.slane %v223, 1
      %v225 = vadd.f32 %v223, %v224
      %vm226 = vcmask 1040384
      %v227 = vsel %vm226, %v217, %v225
      %vm228 = vcmask 484352
      %229 = vst.msk [vmem:[%s165] sm:$0x3] %vm228, %v227
      %p230 = scmp.lt.s32.totalorder %s14, 2
      %s231 = scalar_select %p230, %s14, 2
      %s232 = smul.addr %s231, 2
      %s233 = scalar_lea.vmem %s3, %s232
      // Predicated region
      $region33: #{fault_classifier.2} parent=31 // pred_check
        %p234 = pneg %p100
      $region34: #{fault_classifier.2} parent=31 // pred_check_branch
        %236 = sbr.rel (%p234) target = $region36
      $region35: #{fault_classifier.2} parent=31 // pred_region
        _
      $region36: #{fault_classifier.2} parent=31 // pred_fallthru
        _
    $region32: #{fault_classifier.2} parent=5 // pred_fallthru
      _
    %p237 = scmp.le.s32.totalorder 2, %s9
    // Predicated region
    $region37: #{fault_classifier.2} parent=5 // pred_check
      %p238 = pneg %p237
    $region38: #{fault_classifier.2} parent=5 // pred_check_branch
      %240 = sbr.rel (%p238) target = $region40
    $region39: #{fault_classifier.2} parent=5 // pred_region
      %s241 = ssub.s32 %s9, 2
      // Predicated region
      $region41: #{fault_classifier.2} parent=39 // pred_check
        %p242 = pneg %p106
      $region42: #{fault_classifier.2} parent=39 // pred_check_branch
        %244 = sbr.rel (%p242) target = $region44
      $region43: #{fault_classifier.2} parent=39 // pred_region
        %p245 = scmp.lt.s32.totalorder %s15, 2
        %s246 = scalar_select %p245, %s15, 2
        %s247 = smul.addr %s246, 2
        %s248 = scalar_lea.vmem %s3, %s247
      $region44: #{fault_classifier.2} parent=39 // pred_fallthru
        _
    $region40: #{fault_classifier.2} parent=5 // pred_fallthru
      _
  $region6: #{fault_classifier.2} parent=0 // loop_footer
    %s13 = sadd.s32 1, %s9
  $region7: #{fault_classifier.2} parent=0 // loop_footer_branch
    %8 = sbr.rel target = $region3
  $region8: #{fault_classifier.2} parent=0 // loop_exit
    _

</llo_original>
